<compile_context>
chip_gen: v6e
topology: v6e:2x2x1
jax: 0.10.0
libtpu: 0.0.40
codegen_flags: <defaults>
</compile_context>

<pallas_src>
import jax
import jax.numpy as jnp
import numpy as np
from jax import lax
from jax.experimental import pallas as pl
from jax.experimental.pallas import tpu as pltpu

# ----------------------------- configuration -------------------------------
D_NUMERICAL = 8
CATEGORIES = [7, 11]                      # categorical cardinalities
D_EMBED_MAX = 100
D_EMBED = [min(max(int(c ** 0.5), 2), D_EMBED_MAX) for c in CATEGORIES]   # [2, 3]
D_CAT_SUM = sum(D_EMBED)                  # 5
C_TOTAL = sum(CATEGORIES)                 # 18 (rows of block-diag emb table)
CAT_OFFSETS = [int(x) for x in ([0] + list(np.cumsum(CATEGORIES)[:-1]))]  # [0, 7]
N_CAT = len(CATEGORIES)
D_IN = D_NUMERICAL + D_CAT_SUM            # 13
D_PACK = D_IN + N_CAT                     # 15 (x0 slots + index-carrier rows)
N_CROSS = 2                               # cross_order
MLP_LAYERS = [32, 16]                     # "32-16"
N_CLASSES = 3
BATCH = 256                               # demo batch
BN_EPS = 1e-5


# ------------------------------ Pallas kernel ------------------------------
def deepcross_kernel(x_ref,                 # (D_PACK, TB) f32: rows 0..12 padded
                                            #   numericals, rows 13..14 offset idx
                     emb_ref,               # (D_PACK, C_TOTAL) padded block-diag^T
                     cw_ref, cb_ref,        # (N_CROSS,D_PACK,D_PACK),(N_CROSS,D_PACK,1)
                     w1_ref, b1_ref,        # (H1, D_PACK), (H1, 1)   (BN folded)
                     w2_ref, b2_ref,        # (H2, H1), (H2, 1)       (BN folded)
                     wd_ref, wc_ref, bl_ref,  # (C, H2), (C, D_PACK), (C, 1)
                     out_ref):              # (C, TB)
    x_in = x_ref[...]                                   # (D_PACK, TB)
    tb = x_in.shape[1]

    # --- multi-hot over the block-diagonal offset range (one per cat column) ---
    iota = lax.broadcasted_iota(jnp.int32, (C_TOTAL, tb), 0).astype(jnp.float32)
    mh = (x_in[D_IN:D_IN + 1, :] == iota).astype(jnp.float32)
    for j in range(1, N_CAT):
        mh = mh + (x_in[D_IN + j:D_IN + j + 1, :] == iota).astype(jnp.float32)

    # x0 = padded numericals + gathered embeddings (add, no lane concat).
    # Rows 13..14 of x0 keep the raw index values; all consuming weights have
    # zero columns there, so they never contaminate the result.
    x0 = x_in + jnp.dot(emb_ref[...], mh, preferred_element_type=jnp.float32)

    # --- CrossNetMatrix:  xi = x0 * (W_i xi + b_i) + xi  (unrolled) ------------
    xi = x0
    for i in range(N_CROSS):
        lin = jnp.dot(cw_ref[i], xi, preferred_element_type=jnp.float32) + cb_ref[i]
        xi = x0 * lin + xi

    # --- MLP on x_total (stacked=False): Linear(+folded BN) -> ReLU ------------
    h = jnp.dot(w1_ref[...], x0, preferred_element_type=jnp.float32) + b1_ref[...]
    h = jnp.maximum(h, 0.0)
    h = jnp.dot(w2_ref[...], h, preferred_element_type=jnp.float32) + b2_ref[...]
    h = jnp.maximum(h, 0.0)

    # --- last linear as two dots (no concat([x_deep, x_cross])) ----------------
    out_ref[...] = (jnp.dot(wd_ref[...], h, preferred_element_type=jnp.float32)
                    + jnp.dot(wc_ref[...], xi, preferred_element_type=jnp.float32)
                    + bl_ref[...])


def deepcross_pallas(x_packT, kp, *, grid_steps=1):
    """x_packT: (D_PACK, B) feature-major packed input.  Returns (N_CLASSES, B)."""
    _, B = x_packT.shape
    assert B % grid_steps == 0
    tile_b = B // grid_steps
    if grid_steps > 1:
        assert tile_b % 128 == 0, "per-step batch tile must be lane-aligned"

    def wspec(shape):
        zeros = (0,) * len(shape)
        return pl.BlockSpec(shape, lambda b, _z=zeros: _z)   # weights stay resident

    in_specs = [
        pl.BlockSpec((D_PACK, tile_b), lambda b: (0, b)),
        wspec(kp["embT"].shape),
        wspec(kp["cwT"].shape), wspec(kp["cbT"].shape),
        wspec(kp["w1T"].shape), wspec(kp["b1T"].shape),
        wspec(kp["w2T"].shape), wspec(kp["b2T"].shape),
        wspec(kp["wdT"].shape), wspec(kp["wcT"].shape), wspec(kp["blT"].shape),
    ]
    return pl.pallas_call(
        deepcross_kernel,
        out_shape=jax.ShapeDtypeStruct((N_CLASSES, B), jnp.float32),
        grid=(grid_steps,),
        in_specs=in_specs,
        out_specs=pl.BlockSpec((N_CLASSES, tile_b), lambda b: (0, b)),
        compiler_params=pltpu.CompilerParams(
            dimension_semantics=("parallel",)),   # megacore sharding when steps=2
    )(x_packT, kp["embT"], kp["cwT"], kp["cbT"],
      kp["w1T"], kp["b1T"], kp["w2T"], kp["b2T"],
      kp["wdT"], kp["wcT"], kp["blT"])


def deepcross_forward(x_num, x_cat, kp, *, grid_steps=1):
    """Host-side packing (one merged DMA stream) + transpose of the lane-dense out."""
    B = x_num.shape[0]
    idx = (x_cat + jnp.asarray(CAT_OFFSETS, jnp.int32)[None, :]).astype(jnp.float32)
    x_pack = jnp.concatenate(
        [x_num, jnp.zeros((B, D_CAT_SUM), jnp.float32), idx], axis=1)   # (B, D_PACK)
    outT = deepcross_pallas(x_pack.T, kp, grid_steps=grid_steps)        # (C, B)
    return outT.T                                                       # (B, C)


def pick_grid_steps(batch):
    # v7x has 2 TensorCores/chip: 2 parallel grid steps shard the batch across
    # both; everywhere else a single step avoids per-step pipeline overhead.
    try:
        kind = jax.devices()[0].device_kind.lower()
    except Exception:
        kind = ""
    if "v7" in kind and batch % 256 == 0:
        return 2
    return 1


# ------------------------------ parameter init -----------------------------
def init_params(key):
    ks = list(jax.random.split(key, 32))
    kit = iter(ks)

    def nrm(shape, scale=0.1):
        return (scale * jax.random.normal(next(kit), shape)).astype(jnp.float32)

    p = {}
    # embedding tables
    p["emb"] = [nrm((CATEGORIES[i], D_EMBED[i])) for i in range(N_CAT)]
    # CrossNetMatrix: nn.Linear(d_in, d_in) stored pre-transposed as (in, out)
    p["cross_w"] = nrm((N_CROSS, D_IN, D_IN))
    p["cross_b"] = nrm((N_CROSS, 1, D_IN))
    # MLP layer 1 + BatchNorm1d(h1) eval-mode scale/shift
    h1, h2 = MLP_LAYERS
    p["w1"] = nrm((D_IN, h1))
    p["b1"] = nrm((1, h1))
    g1 = jnp.ones((1, h1), jnp.float32) + nrm((1, h1), 0.01)
    beta1 = nrm((1, h1), 0.01)
    rm1 = jnp.zeros((1, h1), jnp.float32)
    rv1 = jnp.ones((1, h1), jnp.float32)
    p["s1"] = g1 / jnp.sqrt(rv1 + BN_EPS)
    p["t1"] = beta1 - rm1 * p["s1"]
    # MLP layer 2 + BN
    p["w2"] = nrm((h1, h2))
    p["b2"] = nrm((1, h2))
    g2 = jnp.ones((1, h2), jnp.float32) + nrm((1, h2), 0.01)
    beta2 = nrm((1, h2), 0.01)
    rm2 = jnp.zeros((1, h2), jnp.float32)
    rv2 = jnp.ones((1, h2), jnp.float32)
    p["s2"] = g2 / jnp.sqrt(rv2 + BN_EPS)
    p["t2"] = beta2 - rm2 * p["s2"]
    # last linear (stacked=False): split weights for [x_deep, x_cross]
    p["wl_deep"] = nrm((h2, N_CLASSES))
    p["wl_cross"] = nrm((D_IN, N_CLASSES))
    p["bl"] = nrm((1, N_CLASSES))
    return p


def prepare_kernel_params(p):
    """Host-side folding: BN into Linear, padded block-diag emb table, transposes."""
    h1, h2 = MLP_LAYERS

    # block-diagonal embedding table placed in columns [D_NUMERICAL, D_IN),
    # then transposed to feature-major (D_PACK, C_TOTAL).
    emb_pad = jnp.zeros((C_TOTAL, D_PACK), jnp.float32)
    r, c = 0, D_NUMERICAL
    for i in range(N_CAT):
        emb_pad = emb_pad.at[r:r + CATEGORIES[i], c:c + D_EMBED[i]].set(p["emb"][i])
        r += CATEGORIES[i]
        c += D_EMBED[i]
    embT = emb_pad.T                                           # (D_PACK, C_TOTAL)

    def pad_in_rows(w):        # (D_IN, out) -> (D_PACK, out): extra index rows = 0
        return jnp.concatenate(
            [w, jnp.zeros((N_CAT, w.shape[1]), jnp.float32)], axis=0)

    def pad_square(w):         # (D_IN, D_IN) -> (D_PACK, D_PACK), zeros elsewhere
        w = jnp.concatenate([w, jnp.zeros((N_CAT, D_IN), jnp.float32)], axis=0)
        w = jnp.concatenate([w, jnp.zeros((D_PACK, N_CAT), jnp.float32)], axis=1)
        return w

    cwT = jnp.stack([pad_square(p["cross_w"][i]).T for i in range(N_CROSS)])
    cbT = jnp.stack([jnp.concatenate(
        [p["cross_b"][i], jnp.zeros((1, N_CAT), jnp.float32)], axis=1).T
        for i in range(N_CROSS)])                              # (N_CROSS, D_PACK, 1)

    w1 = p["w1"] * p["s1"]                  # fold BN scale into columns
    b1 = p["b1"] * p["s1"] + p["t1"]
    w2 = p["w2"] * p["s2"]
    b2 = p["b2"] * p["s2"] + p["t2"]

    return dict(
        embT=embT, cwT=cwT, cbT=cbT,
        w1T=pad_in_rows(w1).T, b1T=b1.T,            # (h1, D_PACK), (h1, 1)
        w2T=w2.T, b2T=b2.T,                         # (h2, h1), (h2, 1)
        wdT=p["wl_deep"].T,                         # (C, h2)
        wcT=pad_in_rows(p["wl_cross"]).T,           # (C, D_PACK)
        blT=p["bl"].T,                              # (C, 1)
    )


# ------------------------------ pure-JAX reference --------------------------
def reference_forward(x_cat, x_num, p):
    """DeepCrossBackbone.forward (matrix cross, stacked=False), unfolded params."""
    embs = [jnp.take(p["emb"][i], x_cat[:, i], axis=0) for i in range(N_CAT)]
    x0 = jnp.concatenate([x_num] + embs, axis=-1).astype(jnp.float32)
    xi = x0
    for i in range(N_CROSS):
        xi = x0 * (xi @ p["cross_w"][i] + p["cross_b"][i]) + xi
    h = x0 @ p["w1"] + p["b1"]
    h = jnp.maximum(h * p["s1"] + p["t1"], 0.0)
    h = h @ p["w2"] + p["b2"]
    h = jnp.maximum(h * p["s2"] + p["t2"], 0.0)
    return h @ p["wl_deep"] + xi @ p["wl_cross"] + p["bl"]


# ---------------------------------- main ------------------------------------
if __name__ == "__main__":
    key = jax.random.PRNGKey(0)
    kp_key, kc, kn = jax.random.split(key, 3)

    params = init_params(kp_key)
    kernel_params = prepare_kernel_params(params)

    x_cat = jnp.stack(
        [jax.random.randint(jax.random.fold_in(kc, i), (BATCH,), 0, CATEGORIES[i])
         for i in range(N_CAT)], axis=1).astype(jnp.int32)                  # (B, 2)
    x_num = jax.random.normal(kn, (BATCH, D_NUMERICAL), dtype=jnp.float32)  # (B, 8)

    out = deepcross_forward(x_num, x_cat, kernel_params,
                            grid_steps=pick_grid_steps(BATCH))
    out = jax.block_until_ready(out)

    ref = reference_forward(x_cat, x_num, params)
    np.testing.assert_allclose(np.asarray(out), np.asarray(ref), rtol=1e-5, atol=1e-5)

    # TODO(synk): training-mode BatchNorm stat updates / Dropout masking are not
    # implemented; kernel is the eval/inference forward pass.
    print("KERNEL_OK")
</pallas_src>

<mosaic_0001>
module attributes {stable_mosaic.version = 11 : i64} {
  func.func @deepcross_kernel(%arg0: i32, %arg1: memref<15x256xf32, #tpu.memory_space<vmem>>, %arg2: memref<15x18xf32, #tpu.memory_space<vmem>>, %arg3: memref<2x15x15xf32, #tpu.memory_space<vmem>>, %arg4: memref<2x15x1xf32, #tpu.memory_space<vmem>>, %arg5: memref<32x15xf32, #tpu.memory_space<vmem>>, %arg6: memref<32x1xf32, #tpu.memory_space<vmem>>, %arg7: memref<16x32xf32, #tpu.memory_space<vmem>>, %arg8: memref<16x1xf32, #tpu.memory_space<vmem>>, %arg9: memref<3x16xf32, #tpu.memory_space<vmem>>, %arg10: memref<3x15xf32, #tpu.memory_space<vmem>>, %arg11: memref<3x1xf32, #tpu.memory_space<vmem>>, %arg12: memref<3x256xf32, #tpu.memory_space<vmem>>) attributes {dimension_semantics = [#tpu.dimension_semantics<parallel>], iteration_bounds = array<i64: 1>, scalar_prefetch = 0 : i64, scratch_operands = 0 : i64, tpu.core_type = #tpu.core_type<tc>, window_params = [{transform_indices = @transform_0, window_bounds = array<i64: 15, 256>}, {pipeline_mode = #tpu.pipeline_mode<synchronous>, transform_indices = @transform_1, window_bounds = array<i64: 15, 18>}, {pipeline_mode = #tpu.pipeline_mode<synchronous>, transform_indices = @transform_2, window_bounds = array<i64: 2, 15, 15>}, {pipeline_mode = #tpu.pipeline_mode<synchronous>, transform_indices = @transform_3, window_bounds = array<i64: 2, 15, 1>}, {pipeline_mode = #tpu.pipeline_mode<synchronous>, transform_indices = @transform_4, window_bounds = array<i64: 32, 15>}, {pipeline_mode = #tpu.pipeline_mode<synchronous>, transform_indices = @transform_5, window_bounds = array<i64: 32, 1>}, {pipeline_mode = #tpu.pipeline_mode<synchronous>, transform_indices = @transform_6, window_bounds = array<i64: 16, 32>}, {pipeline_mode = #tpu.pipeline_mode<synchronous>, transform_indices = @transform_7, window_bounds = array<i64: 16, 1>}, {pipeline_mode = #tpu.pipeline_mode<synchronous>, transform_indices = @transform_8, window_bounds = array<i64: 3, 16>}, {pipeline_mode = #tpu.pipeline_mode<synchronous>, transform_indices = @transform_9, window_bounds = array<i64: 3, 15>}, {pipeline_mode = #tpu.pipeline_mode<synchronous>, transform_indices = @transform_10, window_bounds = array<i64: 3, 1>}, {transform_indices = @transform_11, window_bounds = array<i64: 3, 256>}]} {
    %c0 = arith.constant 0 : index
    %c0_0 = arith.constant 0 : index
    %0 = vector.load %arg1[%c0, %c0_0] : memref<15x256xf32, #tpu.memory_space<vmem>>, vector<15x256xf32>
    %1 = tpu.iota {dimensions = array<i32: 0>} : vector<18x256xi32>
    %2 = arith.sitofp %1 : vector<18x256xi32> to vector<18x256xf32>
    %3 = vector.extract_strided_slice %0 {offsets = [13, 0], sizes = [1, 256], strides = [1, 1]} : vector<15x256xf32> to vector<1x256xf32>
    %4 = vector.broadcast %3 : vector<1x256xf32> to vector<18x256xf32>
    %5 = arith.cmpf oeq, %4, %2 : vector<18x256xf32>
    %6 = arith.extui %5 : vector<18x256xi1> to vector<18x256xi32>
    %7 = arith.sitofp %6 : vector<18x256xi32> to vector<18x256xf32>
    %8 = vector.extract_strided_slice %0 {offsets = [14, 0], sizes = [1, 256], strides = [1, 1]} : vector<15x256xf32> to vector<1x256xf32>
    %9 = vector.broadcast %8 : vector<1x256xf32> to vector<18x256xf32>
    %10 = arith.cmpf oeq, %9, %2 : vector<18x256xf32>
    %11 = arith.extui %10 : vector<18x256xi1> to vector<18x256xi32>
    %12 = arith.sitofp %11 : vector<18x256xi32> to vector<18x256xf32>
    %13 = arith.addf %7, %12 : vector<18x256xf32>
    %c0_1 = arith.constant 0 : index
    %c0_2 = arith.constant 0 : index
    %14 = vector.load %arg2[%c0_1, %c0_2] : memref<15x18xf32, #tpu.memory_space<vmem>>, vector<15x18xf32>
    %cst = arith.constant dense<0.000000e+00> : vector<15x256xf32>
    %15 = tpu.matmul %14, %13, %cst {dimension_numbers = #tpu.dot_dimension_numbers<[1], [0], [0], [1], [0, 0, 1, 1], [], []>} : vector<15x18xf32>, vector<18x256xf32>, vector<15x256xf32> -> vector<15x256xf32>
    %16 = arith.addf %0, %15 : vector<15x256xf32>
    %c0_3 = arith.constant 0 : index
    %c0_4 = arith.constant 0 : index
    %c0_5 = arith.constant 0 : index
    %17 = vector.load %arg3[%c0_3, %c0_4, %c0_5] : memref<2x15x15xf32, #tpu.memory_space<vmem>>, vector<1x15x15xf32>
    %18 = vector.shape_cast %17 : vector<1x15x15xf32> to vector<15x15xf32>
    %cst_6 = arith.constant dense<0.000000e+00> : vector<15x256xf32>
    %19 = tpu.matmul %18, %16, %cst_6 {dimension_numbers = #tpu.dot_dimension_numbers<[1], [0], [0], [1], [0, 0, 1, 1], [], []>} : vector<15x15xf32>, vector<15x256xf32>, vector<15x256xf32> -> vector<15x256xf32>
    %c0_7 = arith.constant 0 : index
    %c0_8 = arith.constant 0 : index
    %c0_9 = arith.constant 0 : index
    %20 = vector.load %arg4[%c0_7, %c0_8, %c0_9] : memref<2x15x1xf32, #tpu.memory_space<vmem>>, vector<1x15x1xf32>
    %21 = vector.shape_cast %20 : vector<1x15x1xf32> to vector<15x1xf32>
    %22 = vector.broadcast %21 : vector<15x1xf32> to vector<15x256xf32>
    %23 = arith.addf %19, %22 : vector<15x256xf32>
    %24 = arith.mulf %16, %23 : vector<15x256xf32>
    %25 = arith.addf %24, %16 : vector<15x256xf32>
    %c1 = arith.constant 1 : index
    %c0_10 = arith.constant 0 : index
    %c0_11 = arith.constant 0 : index
    %26 = vector.load %arg3[%c1, %c0_10, %c0_11] : memref<2x15x15xf32, #tpu.memory_space<vmem>>, vector<1x15x15xf32>
    %27 = vector.shape_cast %26 : vector<1x15x15xf32> to vector<15x15xf32>
    %cst_12 = arith.constant dense<0.000000e+00> : vector<15x256xf32>
    %28 = tpu.matmul %27, %25, %cst_12 {dimension_numbers = #tpu.dot_dimension_numbers<[1], [0], [0], [1], [0, 0, 1, 1], [], []>} : vector<15x15xf32>, vector<15x256xf32>, vector<15x256xf32> -> vector<15x256xf32>
    %c1_13 = arith.constant 1 : index
    %c0_14 = arith.constant 0 : index
    %c0_15 = arith.constant 0 : index
    %29 = vector.load %arg4[%c1_13, %c0_14, %c0_15] : memref<2x15x1xf32, #tpu.memory_space<vmem>>, vector<1x15x1xf32>
    %30 = vector.shape_cast %29 : vector<1x15x1xf32> to vector<15x1xf32>
    %31 = vector.broadcast %30 : vector<15x1xf32> to vector<15x256xf32>
    %32 = arith.addf %28, %31 : vector<15x256xf32>
    %33 = arith.mulf %16, %32 : vector<15x256xf32>
    %34 = arith.addf %33, %25 : vector<15x256xf32>
    %c0_16 = arith.constant 0 : index
    %c0_17 = arith.constant 0 : index
    %35 = vector.load %arg5[%c0_16, %c0_17] : memref<32x15xf32, #tpu.memory_space<vmem>>, vector<32x15xf32>
    %cst_18 = arith.constant dense<0.000000e+00> : vector<32x256xf32>
    %36 = tpu.matmul %35, %16, %cst_18 {dimension_numbers = #tpu.dot_dimension_numbers<[1], [0], [0], [1], [0, 0, 1, 1], [], []>} : vector<32x15xf32>, vector<15x256xf32>, vector<32x256xf32> -> vector<32x256xf32>
    %c0_19 = arith.constant 0 : index
    %c0_20 = arith.constant 0 : index
    %37 = vector.load %arg6[%c0_19, %c0_20] : memref<32x1xf32, #tpu.memory_space<vmem>>, vector<32x1xf32>
    %38 = vector.broadcast %37 : vector<32x1xf32> to vector<32x256xf32>
    %39 = arith.addf %36, %38 : vector<32x256xf32>
    %cst_21 = arith.constant 0.000000e+00 : f32
    %40 = vector.broadcast %cst_21 : f32 to vector<32x256xf32>
    %41 = arith.maximumf %39, %40 : vector<32x256xf32>
    %c0_22 = arith.constant 0 : index
    %c0_23 = arith.constant 0 : index
    %42 = vector.load %arg7[%c0_22, %c0_23] : memref<16x32xf32, #tpu.memory_space<vmem>>, vector<16x32xf32>
    %cst_24 = arith.constant dense<0.000000e+00> : vector<16x256xf32>
    %43 = tpu.matmul %42, %41, %cst_24 {dimension_numbers = #tpu.dot_dimension_numbers<[1], [0], [0], [1], [0, 0, 1, 1], [], []>} : vector<16x32xf32>, vector<32x256xf32>, vector<16x256xf32> -> vector<16x256xf32>
    %c0_25 = arith.constant 0 : index
    %c0_26 = arith.constant 0 : index
    %44 = vector.load %arg8[%c0_25, %c0_26] : memref<16x1xf32, #tpu.memory_space<vmem>>, vector<16x1xf32>
    %45 = vector.broadcast %44 : vector<16x1xf32> to vector<16x256xf32>
    %46 = arith.addf %43, %45 : vector<16x256xf32>
    %cst_27 = arith.constant 0.000000e+00 : f32
    %47 = vector.broadcast %cst_27 : f32 to vector<16x256xf32>
    %48 = arith.maximumf %46, %47 : vector<16x256xf32>
    %c0_28 = arith.constant 0 : index
    %c0_29 = arith.constant 0 : index
    %49 = vector.load %arg9[%c0_28, %c0_29] : memref<3x16xf32, #tpu.memory_space<vmem>>, vector<3x16xf32>
    %cst_30 = arith.constant dense<0.000000e+00> : vector<3x256xf32>
    %50 = tpu.matmul %49, %48, %cst_30 {dimension_numbers = #tpu.dot_dimension_numbers<[1], [0], [0], [1], [0, 0, 1, 1], [], []>} : vector<3x16xf32>, vector<16x256xf32>, vector<3x256xf32> -> vector<3x256xf32>
    %c0_31 = arith.constant 0 : index
    %c0_32 = arith.constant 0 : index
    %51 = vector.load %arg10[%c0_31, %c0_32] : memref<3x15xf32, #tpu.memory_space<vmem>>, vector<3x15xf32>
    %cst_33 = arith.constant dense<0.000000e+00> : vector<3x256xf32>
    %52 = tpu.matmul %51, %34, %cst_33 {dimension_numbers = #tpu.dot_dimension_numbers<[1], [0], [0], [1], [0, 0, 1, 1], [], []>} : vector<3x15xf32>, vector<15x256xf32>, vector<3x256xf32> -> vector<3x256xf32>
    %53 = arith.addf %50, %52 : vector<3x256xf32>
    %c0_34 = arith.constant 0 : index
    %c0_35 = arith.constant 0 : index
    %54 = vector.load %arg11[%c0_34, %c0_35] : memref<3x1xf32, #tpu.memory_space<vmem>>, vector<3x1xf32>
    %55 = vector.broadcast %54 : vector<3x1xf32> to vector<3x256xf32>
    %56 = arith.addf %53, %55 : vector<3x256xf32>
    %c0_36 = arith.constant 0 : index
    %c0_37 = arith.constant 0 : index
    %57 = vector.load %arg12[%c0_36, %c0_37] : memref<3x256xf32, #tpu.memory_space<vmem>>, vector<3x256xf32>
    tpu.vector_store %arg12[%c0_36, %c0_37], %56 {strides = array<i32>} : memref<3x256xf32, #tpu.memory_space<vmem>>, vector<3x256xf32>,
    return
  }
  func.func @transform_0(%arg0: i32) -> (i32, i32) {
    %c0_i32 = arith.constant 0 : i32
    %c0_i32_0 = arith.constant 0 : i32
    return %c0_i32, %arg0 : i32, i32
  }
  func.func @transform_1(%arg0: i32) -> (i32, i32) {
    %c0_i32 = arith.constant 0 : i32
    %c0_i32_0 = arith.constant 0 : i32
    %c0_i32_1 = arith.constant 0 : i32
    return %c0_i32, %c0_i32_0 : i32, i32
  }
  func.func @transform_2(%arg0: i32) -> (i32, i32, i32) {
    %c0_i32 = arith.constant 0 : i32
    %c0_i32_0 = arith.constant 0 : i32
    %c0_i32_1 = arith.constant 0 : i32
    %c0_i32_2 = arith.constant 0 : i32
    return %c0_i32, %c0_i32_0, %c0_i32_1 : i32, i32, i32
  }
  func.func @transform_3(%arg0: i32) -> (i32, i32, i32) {
    %c0_i32 = arith.constant 0 : i32
    %c0_i32_0 = arith.constant 0 : i32
    %c0_i32_1 = arith.constant 0 : i32
    %c0_i32_2 = arith.constant 0 : i32
    return %c0_i32, %c0_i32_0, %c0_i32_1 : i32, i32, i32
  }
  func.func @transform_4(%arg0: i32) -> (i32, i32) {
    %c0_i32 = arith.constant 0 : i32
    %c0_i32_0 = arith.constant 0 : i32
    %c0_i32_1 = arith.constant 0 : i32
    return %c0_i32, %c0_i32_0 : i32, i32
  }
  func.func @transform_5(%arg0: i32) -> (i32, i32) {
    %c0_i32 = arith.constant 0 : i32
    %c0_i32_0 = arith.constant 0 : i32
    %c0_i32_1 = arith.constant 0 : i32
    return %c0_i32, %c0_i32_0 : i32, i32
  }
  func.func @transform_6(%arg0: i32) -> (i32, i32) {
    %c0_i32 = arith.constant 0 : i32
    %c0_i32_0 = arith.constant 0 : i32
    %c0_i32_1 = arith.constant 0 : i32
    return %c0_i32, %c0_i32_0 : i32, i32
  }
  func.func @transform_7(%arg0: i32) -> (i32, i32) {
    %c0_i32 = arith.constant 0 : i32
    %c0_i32_0 = arith.constant 0 : i32
    %c0_i32_1 = arith.constant 0 : i32
    return %c0_i32, %c0_i32_0 : i32, i32
  }
  func.func @transform_8(%arg0: i32) -> (i32, i32) {
    %c0_i32 = arith.constant 0 : i32
    %c0_i32_0 = arith.constant 0 : i32
    %c0_i32_1 = arith.constant 0 : i32
    return %c0_i32, %c0_i32_0 : i32, i32
  }
  func.func @transform_9(%arg0: i32) -> (i32, i32) {
    %c0_i32 = arith.constant 0 : i32
    %c0_i32_0 = arith.constant 0 : i32
    %c0_i32_1 = arith.constant 0 : i32
    return %c0_i32, %c0_i32_0 : i32, i32
  }
  func.func @transform_10(%arg0: i32) -> (i32, i32) {
    %c0_i32 = arith.constant 0 : i32
    %c0_i32_0 = arith.constant 0 : i32
    %c0_i32_1 = arith.constant 0 : i32
    return %c0_i32, %c0_i32_0 : i32, i32
  }
  func.func @transform_11(%arg0: i32) -> (i32, i32) {
    %c0_i32 = arith.constant 0 : i32
    %c0_i32_0 = arith.constant 0 : i32
    return %c0_i32, %arg0 : i32, i32
  }
}

</mosaic_0001>

<llo_original>
// kernel: tpu_custom_call.1
$region0: #{tpu_custom_call.1}
  #allocation0 [shape = 'u32[]', space=smem, size = 0x4, offset = 0x4, fixed_abs, tag = 'smem constant byte address 0x4 - core index']
  #allocation1 [shape = 'u32[144,128]{1,0:T(1,128)}', space=vmem, size = 0x12000, scoped, tag = 'internal scratch']
  %s0 = inlined_call_operand.vmem [shape: f32[15,256], index: 0, kind: input, shape index: {}]
  %s1 = inlined_call_operand.vmem [shape: f32[15,18], index: 1, kind: input, shape index: {}]
  %s2 = inlined_call_operand.vmem [shape: f32[2,15,15], index: 2, kind: input, shape index: {}]
  %s3 = inlined_call_operand.vmem [shape: f32[2,15,1], index: 3, kind: input, shape index: {}]
  %s4 = inlined_call_operand.vmem [shape: f32[32,15], index: 4, kind: input, shape index: {}]
  %s5 = inlined_call_operand.vmem [shape: f32[32,1], index: 5, kind: input, shape index: {}]
  %s6 = inlined_call_operand.vmem [shape: f32[16,32], index: 6, kind: input, shape index: {}]
  %s7 = inlined_call_operand.vmem [shape: f32[16,1], index: 7, kind: input, shape index: {}]
  %s8 = inlined_call_operand.vmem [shape: f32[3,16], index: 8, kind: input, shape index: {}]
  %s9 = inlined_call_operand.vmem [shape: f32[3,15], index: 9, kind: input, shape index: {}]
  %s10 = inlined_call_operand.vmem [shape: f32[3,1], index: 10, kind: input, shape index: {}]
  %s11 = inlined_call_operand.hbm [shape: f32[3,256], index: 11, kind: output, shape index: {}]
  %s12 = sld [smem:[#allocation0]]
  $region54: #{tpu_custom_call.1} parent=0
    _
  %s14 = ssub.s32 1, %s12
  %s15 = scalar_select 0, %s14, %s12
  $region1: #{tpu_custom_call.1} parent=0
    #allocation2 [shape = 'u8[4096]{0}', space=vmem, size = 0x1000, scoped, tag = 'output window, operand 0, single buffered']
    #allocation3 [shape = 's32[1]{0}', space=sflag, size = 0x4, scoped, tag = 'scoped memory for tpu_custom_call.1']
    %16 = vsyncpa [#allocation3], 0
    // Predicated region
    $region2: #{tpu_custom_call.1} parent=1 // pred_check
      _
    $region3: #{tpu_custom_call.1} parent=1 // pred_check_branch
      %18 = sbr.rel (0) target = $region5
    $region4: #{tpu_custom_call.1} parent=1 // pred_region
      _
    $region5: #{tpu_custom_call.1} parent=1 // pred_fallthru
      _
    // Predicated region
    $region6: #{tpu_custom_call.1} parent=1 // pred_check
      _
    $region7: #{tpu_custom_call.1} parent=1 // pred_check_branch
      %20 = sbr.rel (0) target = $region9
    $region8: #{tpu_custom_call.1} parent=1 // pred_region
      _
    $region9: #{tpu_custom_call.1} parent=1 // pred_fallthru
      _
    // Predicated region
    $region10: #{tpu_custom_call.1} parent=1 // pred_check
      _
    $region11: #{tpu_custom_call.1} parent=1 // pred_check_branch
      %22 = sbr.rel (0) target = $region13
    $region12: #{tpu_custom_call.1} parent=1 // pred_region
      _
    $region13: #{tpu_custom_call.1} parent=1 // pred_fallthru
      _
    // Predicated region
    $region14: #{tpu_custom_call.1} parent=1 // pred_check
      _
    $region15: #{tpu_custom_call.1} parent=1 // pred_check_branch
      %24 = sbr.rel (0) target = $region17
    $region16: #{tpu_custom_call.1} parent=1 // pred_region
      _
    $region17: #{tpu_custom_call.1} parent=1 // pred_fallthru
      _
    // Predicated region
    $region18: #{tpu_custom_call.1} parent=1 // pred_check
      _
    $region19: #{tpu_custom_call.1} parent=1 // pred_check_branch
      %26 = sbr.rel (0) target = $region21
    $region20: #{tpu_custom_call.1} parent=1 // pred_region
      _
    $region21: #{tpu_custom_call.1} parent=1 // pred_fallthru
      _
    // Predicated region
    $region22: #{tpu_custom_call.1} parent=1 // pred_check
      _
    $region23: #{tpu_custom_call.1} parent=1 // pred_check_branch
      %28 = sbr.rel (0) target = $region25
    $region24: #{tpu_custom_call.1} parent=1 // pred_region
      _
    $region25: #{tpu_custom_call.1} parent=1 // pred_fallthru
      _
    // Predicated region
    $region26: #{tpu_custom_call.1} parent=1 // pred_check
      _
    $region27: #{tpu_custom_call.1} parent=1 // pred_check_branch
      %30 = sbr.rel (0) target = $region29
    $region28: #{tpu_custom_call.1} parent=1 // pred_region
      _
    $region29: #{tpu_custom_call.1} parent=1 // pred_fallthru
      _
    // Predicated region
    $region30: #{tpu_custom_call.1} parent=1 // pred_check
      _
    $region31: #{tpu_custom_call.1} parent=1 // pred_check_branch
      %32 = sbr.rel (0) target = $region33
    $region32: #{tpu_custom_call.1} parent=1 // pred_region
      _
    $region33: #{tpu_custom_call.1} parent=1 // pred_fallthru
      _
    // Predicated region
    $region34: #{tpu_custom_call.1} parent=1 // pred_check
      _
    $region35: #{tpu_custom_call.1} parent=1 // pred_check_branch
      %34 = sbr.rel (0) target = $region37
    $region36: #{tpu_custom_call.1} parent=1 // pred_region
      _
    $region37: #{tpu_custom_call.1} parent=1 // pred_fallthru
      _
    // Predicated region
    $region38: #{tpu_custom_call.1} parent=1 // pred_check
      _
    $region39: #{tpu_custom_call.1} parent=1 // pred_check_branch
      %36 = sbr.rel (0) target = $region41
    $region40: #{tpu_custom_call.1} parent=1 // pred_region
      _
    $region41: #{tpu_custom_call.1} parent=1 // pred_fallthru
      _
    // Predicated region
    $region42: #{tpu_custom_call.1} parent=1 // pred_check
      _
    $region43: #{tpu_custom_call.1} parent=1 // pred_check_branch
      %38 = sbr.rel (0) target = $region45
    $region44: #{tpu_custom_call.1} parent=1 // pred_region
      _
    $region45: #{tpu_custom_call.1} parent=1 // pred_fallthru
      _
    %v39 = vld [vmem:[%s0] sm:$0xff]
    %v40 = vld [vmem:[%s0 + $0x8] sm:$0xff]
    %v41 = vld [vmem:[%s0 + $0x10] sm:$0x7f]
    %v42 = vld [vmem:[%s0 + $0x18] sm:$0x7f]
    %v43 = vlaneseq
    %v44 = vshrl.u32 %v43, 7
    %v45 = vadd.s32 %v44, 8
    %v46 = vadd.s32 %v44, 16
    %v47 = vcvt.s32.f32 %v44
    %v48 = vcvt.s32.f32 %v45
    %v49 = vcvt.s32.f32 %v46
    %v50 = vlaneseq
    %v51 = vshrl.u32 %v50, 7
    %v52 = vsub.s32 5, %v51
    %v53 = vrot.slane %v41, %v52
    %v54 = vlaneseq
    %v55 = vshrl.u32 %v54, 7
    %v56 = vsub.s32 5, %v55
    %v57 = vrot.slane %v42, %v56
    %vm58 = vcmp.eq.f32.partialorder %v53, %v47
    %vm59 = vcmp.eq.f32.partialorder %v57, %v47
    %vm60 = vcmp.eq.f32.partialorder %v53, %v48
    %vm61 = vcmp.eq.f32.partialorder %v57, %v48
    %vm62 = vcmp.eq.f32.partialorder %v53, %v49
    %vm63 = vcmp.eq.f32.partialorder %v57, %v49
    %v64 = vsel %vm58, 1, 0
    %v65 = vsel %vm59, 1, 0
    %v66 = vsel %vm60, 1, 0
    %v67 = vsel %vm61, 1, 0
    %v68 = vsel %vm62, 1, 0
    %v69 = vsel %vm63, 1, 0
    %v70 = vcvt.s32.f32 %v64
    %v71 = vcvt.s32.f32 %v65
    %v72 = vcvt.s32.f32 %v66
    %v73 = vcvt.s32.f32 %v67
    %v74 = vcvt.s32.f32 %v68
    %v75 = vcvt.s32.f32 %v69
    %v76 = vlaneseq
    %v77 = vshrl.u32 %v76, 7
    %v78 = vsub.s32 6, %v77
    %v79 = vrot.slane %v41, %v78
    %v80 = vlaneseq
    %v81 = vshrl.u32 %v80, 7
    %v82 = vsub.s32 6, %v81
    %v83 = vrot.slane %v42, %v82
    %vm84 = vcmp.eq.f32.partialorder %v79, %v47
    %vm85 = vcmp.eq.f32.partialorder %v83, %v47
    %vm86 = vcmp.eq.f32.partialorder %v79, %v48
    %vm87 = vcmp.eq.f32.partialorder %v83, %v48
    %vm88 = vcmp.eq.f32.partialorder %v79, %v49
    %vm89 = vcmp.eq.f32.partialorder %v83, %v49
    %v90 = vsel %vm84, 1, 0
    %v91 = vsel %vm85, 1, 0
    %v92 = vsel %vm86, 1, 0
    %v93 = vsel %vm87, 1, 0
    %v94 = vsel %vm88, 1, 0
    %v95 = vsel %vm89, 1, 0
    %v96 = vcvt.s32.f32 %v90
    %v97 = vcvt.s32.f32 %v91
    %v98 = vcvt.s32.f32 %v92
    %v99 = vcvt.s32.f32 %v93
    %v100 = vcvt.s32.f32 %v94
    %v101 = vcvt.s32.f32 %v95
    %v102 = vadd.f32 %v70, %v96
    %v103 = vadd.f32 %v71, %v97
    %v104 = vadd.f32 %v72, %v98
    %v105 = vadd.f32 %v73, %v99
    %v106 = vadd.f32 %v74, %v100
    %v107 = vadd.f32 %v75, %v101
    %v108 = vld [vmem:[%s1] sm:$0xff]
    %v109 = vld [vmem:[%s1 + $0x8] sm:$0x7f]
    %vm110 = vcmask 146432
    %v112 = vsel %vm110, %v108, 0
    %v115 = vsel %vm110, %v109, 0
    %vm117 = vcmask 1041408
    %v119 = vsel %vm117, %v106, 0
    %v122 = vsel %vm117, %v107, 0
    %124 = vmatprep.subr.mxu0 0.0
    %125 = vmatpush1.msra.mxu0 0.0
    %126 = vmatprep.subr.mxu0 0.0
    %127 = vmatpush1.msra.mxu0 0.0
    %128 = vmatprep.subr.mxu0 0.0
    %129 = vmatpush1.msra.mxu0 0.0
    %130 = vmatprep.subr.mxu0 0.0
    %131 = vmatpush1.msra.mxu0 0.0
    %132 = vmatprep.subr.mxu0 0.0
    %133 = vmatpush1.msra.mxu0 0.0
    %134 = vmatprep.subr.mxu0 0.0
    %135 = vmatpush1.msra.mxu0 0.0
    %136 = vmatprep.subr.mxu0 0.0
    %137 = vmatpush1.msra.mxu0 0.0
    %138 = vmatprep.subr.mxu0 0.0
    %139 = vmatpush1.msra.mxu0 0.0
    %140 = vmatprep.subr.mxu0 0.0
    %141 = vmatpush1.msra.mxu0 0.0
    %142 = vmatprep.subr.mxu0 0.0
    %143 = vmatpush1.msra.mxu0 0.0
    %144 = vmatprep.subr.mxu0 0.0
    %145 = vmatpush1.msra.mxu0 0.0
    %146 = vmatprep.subr.mxu0 0.0
    %147 = vmatpush1.msra.mxu0 0.0
    %148 = vmatprep.subr.mxu0 0.0
    %149 = vmatpush1.msra.mxu0 0.0
    %150 = vmatprep.subr.mxu0 %v122
    %151 = vmatpush1.msra.mxu0 %v119
    %152 = vmatprep.subr.mxu0 %v105
    %153 = vmatpush1.msra.mxu0 %v104
    %154 = vmatprep.subr.mxu0 %v103
    %155 = vmatpush1.msra.mxu0 %v102
    %156 = vmatprep.subr.mxu0 0.0
    %157 = vmatpush2.msra.mxu0 0.0
    %158 = vmatprep.subr.mxu0 0.0
    %159 = vmatpush2.msra.mxu0 0.0
    %160 = vmatprep.subr.mxu0 0.0
    %161 = vmatpush2.msra.mxu0 0.0
    %162 = vmatprep.subr.mxu0 0.0
    %163 = vmatpush2.msra.mxu0 0.0
    %164 = vmatprep.subr.mxu0 0.0
    %165 = vmatpush2.msra.mxu0 0.0
    %166 = vmatprep.subr.mxu0 0.0
    %167 = vmatpush2.msra.mxu0 0.0
    %168 = vmatprep.subr.mxu0 0.0
    %169 = vmatpush2.msra.mxu0 0.0
    %170 = vmatprep.subr.mxu0 0.0
    %171 = vmatpush2.msra.mxu0 0.0
    %172 = vmatprep.subr.mxu0 0.0
    %173 = vmatpush2.msra.mxu0 0.0
    %174 = vmatprep.subr.mxu0 0.0
    %175 = vmatpush2.msra.mxu0 0.0
    %176 = vmatprep.subr.mxu0 0.0
    %177 = vmatpush2.msra.mxu0 0.0
    %178 = vmatprep.subr.mxu0 0.0
    %179 = vmatpush2.msra.mxu0 0.0
    %180 = vmatprep.subr.mxu0 0.0
    %181 = vmatpush2.msra.mxu0 0.0
    %182 = vmatprep.subr.mxu0 0.0
    %183 = vmatpush2.msra.mxu0 0.0
    %184 = vmatprep.subr.mxu0 0.0
    %185 = vmatpush2.msra.mxu0 0.0
    %186 = vmatprep.subr.mxu0 0.0
    %187 = vmatpush2.msra.mxu0 0.0
    %188 = vmatprep.mubr.f32.mxu0 0.0
    %189 = vmatmul.mubr.f32.gmra.mxu0 %v112
    %v190 = vpop.f32.mrf.mxu0
    %v191 = vadd.f32 0.0, %v190
    %v192 = vpop.f32.mrf.mxu0
    %v193 = vadd.f32 0.0, %v192
    %194 = vmatprep.mubr.f32.mxu0 0.0
    %195 = vmatmul.mubr.f32.gmra.mxu0 %v115
    %v196 = vpop.f32.mrf.mxu0
    %v197 = vadd.f32 0.0, %v196
    %v198 = vpop.f32.mrf.mxu0
    %v199 = vadd.f32 0.0, %v198
    %200 = vdwg.mxu0
    %v201 = vadd.f32 %v39, %v191
    %v202 = vadd.f32 %v40, %v193
    %v203 = vadd.f32 %v41, %v197
    %v204 = vadd.f32 %v42, %v199
    %v205 = vld [vmem:[%s2] sm:$0xff]
    %v206 = vld [vmem:[%s2 + $0x8] sm:$0x7f]
    %v207 = vld [vmem:[%s3] sm:$0xff]
    %v208 = vld [vmem:[%s3 + $0x8] sm:$0x7f]
    %210 = vset.pattern.permute.xlu0 0
    %211 = vperm.xlu0 %210, %v207
    %v212 = vpop.permute.xlu0 %211
    %215 = vset.pattern.permute.xlu0 0
    %216 = vperm.xlu0 %215, %v208
    %v217 = vpop.permute.xlu0 %216
    %vm219 = vcmask 121856
    %v221 = vsel %vm219, %v205, 0
    %v224 = vsel %vm219, %v206, 0
    %vm226 = vcmask 1046528
    %v228 = vsel %vm226, %v203, 0
    %v231 = vsel %vm226, %v204, 0
    %233 = vmatprep.subr.mxu0 0.0
    %234 = vmatpush1.msra.mxu0 0.0
    %235 = vmatprep.subr.mxu0 0.0
    %236 = vmatpush1.msra.mxu0 0.0
    %237 = vmatprep.subr.mxu0 0.0
    %238 = vmatpush1.msra.mxu0 0.0
    %239 = vmatprep.subr.mxu0 0.0
    %240 = vmatpush1.msra.mxu0 0.0
    %241 = vmatprep.subr.mxu0 0.0
    %242 = vmatpush1.msra.mxu0 0.0
    %243 = vmatprep.subr.mxu0 0.0
    %244 = vmatpush1.msra.mxu0 0.0
    %245 = vmatprep.subr.mxu0 0.0
    %246 = vmatpush1.msra.mxu0 0.0
    %247 = vmatprep.subr.mxu0 0.0
    %248 = vmatpush1.msra.mxu0 0.0
    %249 = vmatprep.subr.mxu0 0.0
    %250 = vmatpush1.msra.mxu0 0.0
    %251 = vmatprep.subr.mxu0 0.0
    %252 = vmatpush1.msra.mxu0 0.0
    %253 = vmatprep.subr.mxu0 0.0
    %254 = vmatpush1.msra.mxu0 0.0
    %255 = vmatprep.subr.mxu0 0.0
    %256 = vmatpush1.msra.mxu0 0.0
    %257 = vmatprep.subr.mxu0 0.0
    %258 = vmatpush1.msra.mxu0 0.0
    %259 = vmatprep.subr.mxu0 0.0
    %260 = vmatpush1.msra.mxu0 0.0
    %261 = vmatprep.subr.mxu0 %v231
    %262 = vmatpush1.msra.mxu0 %v228
    %263 = vmatprep.subr.mxu0 %v202
    %264 = vmatpush1.msra.mxu0 %v201
    %265 = vmatprep.subr.mxu0 0.0
    %266 = vmatpush2.msra.mxu0 0.0
    %267 = vmatprep.subr.mxu0 0.0
    %268 = vmatpush2.msra.mxu0 0.0
    %269 = vmatprep.subr.mxu0 0.0
    %270 = vmatpush2.msra.mxu0 0.0
    %271 = vmatprep.subr.mxu0 0.0
    %272 = vmatpush2.msra.mxu0 0.0
    %273 = vmatprep.subr.mxu0 0.0
    %274 = vmatpush2.msra.mxu0 0.0
    %275 = vmatprep.subr.mxu0 0.0
    %276 = vmatpush2.msra.mxu0 0.0
    %277 = vmatprep.subr.mxu0 0.0
    %278 = vmatpush2.msra.mxu0 0.0
    %279 = vmatprep.subr.mxu0 0.0
    %280 = vmatpush2.msra.mxu0 0.0
    %281 = vmatprep.subr.mxu0 0.0
    %282 = vmatpush2.msra.mxu0 0.0
    %283 = vmatprep.subr.mxu0 0.0
    %284 = vmatpush2.msra.mxu0 0.0
    %285 = vmatprep.subr.mxu0 0.0
    %286 = vmatpush2.msra.mxu0 0.0
    %287 = vmatprep.subr.mxu0 0.0
    %288 = vmatpush2.msra.mxu0 0.0
    %289 = vmatprep.subr.mxu0 0.0
    %290 = vmatpush2.msra.mxu0 0.0
    %291 = vmatprep.subr.mxu0 0.0
    %292 = vmatpush2.msra.mxu0 0.0
    %293 = vmatprep.subr.mxu0 0.0
    %294 = vmatpush2.msra.mxu0 0.0
    %295 = vmatprep.subr.mxu0 0.0
    %296 = vmatpush2.msra.mxu0 0.0
    %297 = vmatprep.mubr.f32.mxu0 0.0
    %298 = vmatmul.mubr.f32.gmra.mxu0 %v221
    %v299 = vpop.f32.mrf.mxu0
    %v300 = vadd.f32 %v212, %v299
    %v301 = vpop.f32.mrf.mxu0
    %v302 = vadd.f32 %v212, %v301
    %303 = vmatprep.mubr.f32.mxu0 0.0
    %304 = vmatmul.mubr.f32.gmra.mxu0 %v224
    %v305 = vpop.f32.mrf.mxu0
    %v306 = vadd.f32 %v217, %v305
    %v307 = vpop.f32.mrf.mxu0
    %v308 = vadd.f32 %v217, %v307
    %309 = vdwg.mxu0
    %v310 = vmul.f32 %v201, %v300
    %v311 = vmul.f32 %v202, %v302
    %v312 = vmul.f32 %v203, %v306
    %v313 = vmul.f32 %v204, %v308
    %v314 = vadd.f32 %v310, %v201
    %v315 = vadd.f32 %v311, %v202
    %v316 = vadd.f32 %v312, %v203
    %v317 = vadd.f32 %v313, %v204
    %s318 = scalar_lea.vmem %s2, 16
    %v319 = vld [vmem:[%s318] sm:$0xff]
    %v320 = vld [vmem:[%s318 + $0x8] sm:$0x7f]
    %s321 = scalar_lea.vmem %s3, 16
    %v322 = vld [vmem:[%s321] sm:$0xff]
    %v323 = vld [vmem:[%s321 + $0x8] sm:$0x7f]
    %325 = vset.pattern.permute.xlu0 0
    %326 = vperm.xlu0 %325, %v322
    %v327 = vpop.permute.xlu0 %326
    %330 = vset.pattern.permute.xlu0 0
    %331 = vperm.xlu0 %330, %v323
    %v332 = vpop.permute.xlu0 %331
    %v335 = vsel %vm219, %v319, 0
    %v338 = vsel %vm219, %v320, 0
    %v341 = vsel %vm226, %v316, 0
    %v344 = vsel %vm226, %v317, 0
    %346 = vmatprep.subr.mxu0 0.0
    %347 = vmatpush1.msra.mxu0 0.0
    %348 = vmatprep.subr.mxu0 0.0
    %349 = vmatpush1.msra.mxu0 0.0
    %350 = vmatprep.subr.mxu0 0.0
    %351 = vmatpush1.msra.mxu0 0.0
    %352 = vmatprep.subr.mxu0 0.0
    %353 = vmatpush1.msra.mxu0 0.0
    %354 = vmatprep.subr.mxu0 0.0
    %355 = vmatpush1.msra.mxu0 0.0
    %356 = vmatprep.subr.mxu0 0.0
    %357 = vmatpush1.msra.mxu0 0.0
    %358 = vmatprep.subr.mxu0 0.0
    %359 = vmatpush1.msra.mxu0 0.0
    %360 = vmatprep.subr.mxu0 0.0
    %361 = vmatpush1.msra.mxu0 0.0
    %362 = vmatprep.subr.mxu0 0.0
    %363 = vmatpush1.msra.mxu0 0.0
    %364 = vmatprep.subr.mxu0 0.0
    %365 = vmatpush1.msra.mxu0 0.0
    %366 = vmatprep.subr.mxu0 0.0
    %367 = vmatpush1.msra.mxu0 0.0
    %368 = vmatprep.subr.mxu0 0.0
    %369 = vmatpush1.msra.mxu0 0.0
    %370 = vmatprep.subr.mxu0 0.0
    %371 = vmatpush1.msra.mxu0 0.0
    %372 = vmatprep.subr.mxu0 0.0
    %373 = vmatpush1.msra.mxu0 0.0
    %374 = vmatprep.subr.mxu0 %v344
    %375 = vmatpush1.msra.mxu0 %v341
    %376 = vmatprep.subr.mxu0 %v315
    %377 = vmatpush1.msra.mxu0 %v314
    %378 = vmatprep.subr.mxu0 0.0
    %379 = vmatpush2.msra.mxu0 0.0
    %380 = vmatprep.subr.mxu0 0.0
    %381 = vmatpush2.msra.mxu0 0.0
    %382 = vmatprep.subr.mxu0 0.0
    %383 = vmatpush2.msra.mxu0 0.0
    %384 = vmatprep.subr.mxu0 0.0
    %385 = vmatpush2.msra.mxu0 0.0
    %386 = vmatprep.subr.mxu0 0.0
    %387 = vmatpush2.msra.mxu0 0.0
    %388 = vmatprep.subr.mxu0 0.0
    %389 = vmatpush2.msra.mxu0 0.0
    %390 = vmatprep.subr.mxu0 0.0
    %391 = vmatpush2.msra.mxu0 0.0
    %392 = vmatprep.subr.mxu0 0.0
    %393 = vmatpush2.msra.mxu0 0.0
    %394 = vmatprep.subr.mxu0 0.0
    %395 = vmatpush2.msra.mxu0 0.0
    %396 = vmatprep.subr.mxu0 0.0
    %397 = vmatpush2.msra.mxu0 0.0
    %398 = vmatprep.subr.mxu0 0.0
    %399 = vmatpush2.msra.mxu0 0.0
    %400 = vmatprep.subr.mxu0 0.0
    %401 = vmatpush2.msra.mxu0 0.0
    %402 = vmatprep.subr.mxu0 0.0
    %403 = vmatpush2.msra.mxu0 0.0
    %404 = vmatprep.subr.mxu0 0.0
    %405 = vmatpush2.msra.mxu0 0.0
    %406 = vmatprep.subr.mxu0 0.0
    %407 = vmatpush2.msra.mxu0 0.0
    %408 = vmatprep.subr.mxu0 0.0
    %409 = vmatpush2.msra.mxu0 0.0
    %410 = vmatprep.mubr.f32.mxu0 0.0
    %411 = vmatmul.mubr.f32.gmra.mxu0 %v335
    %v412 = vpop.f32.mrf.mxu0
    %v413 = vadd.f32 %v327, %v412
    %v414 = vpop.f32.mrf.mxu0
    %v415 = vadd.f32 %v327, %v414
    %416 = vmatprep.mubr.f32.mxu0 0.0
    %417 = vmatmul.mubr.f32.gmra.mxu0 %v338
    %v418 = vpop.f32.mrf.mxu0
    %v419 = vadd.f32 %v332, %v418
    %v420 = vpop.f32.mrf.mxu0
    %v421 = vadd.f32 %v332, %v420
    %422 = vdwg.mxu0
    %v423 = vmul.f32 %v201, %v413
    %v424 = vmul.f32 %v202, %v415
    %v425 = vmul.f32 %v203, %v419
    %v426 = vmul.f32 %v204, %v421
    %v427 = vadd.f32 %v423, %v314
    %v428 = vadd.f32 %v424, %v315
    %v429 = vadd.f32 %v425, %v316
    %v430 = vadd.f32 %v426, %v317
    %v431 = vld [vmem:[%s4] sm:$0xff]
    %v432 = vld [vmem:[%s4 + $0x8] sm:$0xff]
    %v433 = vld [vmem:[%s4 + $0x10] sm:$0xff]
    %v434 = vld [vmem:[%s4 + $0x18] sm:$0xff]
    %v435 = vld [vmem:[%s5] sm:$0xff]
    %v436 = vld [vmem:[%s5 + $0x8] sm:$0xff]
    %v437 = vld [vmem:[%s5 + $0x10] sm:$0xff]
    %v438 = vld [vmem:[%s5 + $0x18] sm:$0xff]
    %440 = vset.pattern.permute.xlu0 0
    %441 = vperm.xlu0 %440, %v435
    %v442 = vpop.permute.xlu0 %441
    %445 = vset.pattern.permute.xlu0 0
    %446 = vperm.xlu0 %445, %v436
    %v447 = vpop.permute.xlu0 %446
    %450 = vset.pattern.permute.xlu0 0
    %451 = vperm.xlu0 %450, %v437
    %v452 = vpop.permute.xlu0 %451
    %455 = vset.pattern.permute.xlu0 0
    %456 = vperm.xlu0 %455, %v438
    %v457 = vpop.permute.xlu0 %456
    %v460 = vsel %vm219, %v431, 0
    %v463 = vsel %vm219, %v432, 0
    %v466 = vsel %vm219, %v433, 0
    %v469 = vsel %vm219, %v434, 0
    %471 = vmatprep.subr.mxu0 0.0
    %472 = vmatpush1.msra.mxu0 0.0
    %473 = vmatprep.subr.mxu0 0.0
    %474 = vmatpush1.msra.mxu0 0.0
    %475 = vmatprep.subr.mxu0 0.0
    %476 = vmatpush1.msra.mxu0 0.0
    %477 = vmatprep.subr.mxu0 0.0
    %478 = vmatpush1.msra.mxu0 0.0
    %479 = vmatprep.subr.mxu0 0.0
    %480 = vmatpush1.msra.mxu0 0.0
    %481 = vmatprep.subr.mxu0 0.0
    %482 = vmatpush1.msra.mxu0 0.0
    %483 = vmatprep.subr.mxu0 0.0
    %484 = vmatpush1.msra.mxu0 0.0
    %485 = vmatprep.subr.mxu0 0.0
    %486 = vmatpush1.msra.mxu0 0.0
    %487 = vmatprep.subr.mxu0 0.0
    %488 = vmatpush1.msra.mxu0 0.0
    %489 = vmatprep.subr.mxu0 0.0
    %490 = vmatpush1.msra.mxu0 0.0
    %491 = vmatprep.subr.mxu0 0.0
    %492 = vmatpush1.msra.mxu0 0.0
    %493 = vmatprep.subr.mxu0 0.0
    %494 = vmatpush1.msra.mxu0 0.0
    %495 = vmatprep.subr.mxu0 0.0
    %496 = vmatpush1.msra.mxu0 0.0
    %497 = vmatprep.subr.mxu0 0.0
    %498 = vmatpush1.msra.mxu0 0.0
    %499 = vmatprep.subr.mxu0 %v231
    %500 = vmatpush1.msra.mxu0 %v228
    %501 = vmatprep.subr.mxu0 %v202
    %502 = vmatpush1.msra.mxu0 %v201
    %503 = vmatprep.subr.mxu0 0.0
    %504 = vmatpush2.msra.mxu0 0.0
    %505 = vmatprep.subr.mxu0 0.0
    %506 = vmatpush2.msra.mxu0 0.0
    %507 = vmatprep.subr.mxu0 0.0
    %508 = vmatpush2.msra.mxu0 0.0
    %509 = vmatprep.subr.mxu0 0.0
    %510 = vmatpush2.msra.mxu0 0.0
    %511 = vmatprep.subr.mxu0 0.0
    %512 = vmatpush2.msra.mxu0 0.0
    %513 = vmatprep.subr.mxu0 0.0
    %514 = vmatpush2.msra.mxu0 0.0
    %515 = vmatprep.subr.mxu0 0.0
    %516 = vmatpush2.msra.mxu0 0.0
    %517 = vmatprep.subr.mxu0 0.0
    %518 = vmatpush2.msra.mxu0 0.0
    %519 = vmatprep.subr.mxu0 0.0
    %520 = vmatpush2.msra.mxu0 0.0
    %521 = vmatprep.subr.mxu0 0.0
    %522 = vmatpush2.msra.mxu0 0.0
    %523 = vmatprep.subr.mxu0 0.0
    %524 = vmatpush2.msra.mxu0 0.0
    %525 = vmatprep.subr.mxu0 0.0
    %526 = vmatpush2.msra.mxu0 0.0
    %527 = vmatprep.subr.mxu0 0.0
    %528 = vmatpush2.msra.mxu0 0.0
    %529 = vmatprep.subr.mxu0 0.0
    %530 = vmatpush2.msra.mxu0 0.0
    %531 = vmatprep.subr.mxu0 0.0
    %532 = vmatpush2.msra.mxu0 0.0
    %533 = vmatprep.subr.mxu0 0.0
    %534 = vmatpush2.msra.mxu0 0.0
    %535 = vmatprep.mubr.f32.mxu0 0.0
    %536 = vmatmul.mubr.f32.gmra.mxu0 %v460
    %v537 = vpop.f32.mrf.mxu0
    %v538 = vadd.f32 %v442, %v537
    %v539 = vpop.f32.mrf.mxu0
    %v540 = vadd.f32 %v442, %v539
    %541 = vmatprep.mubr.f32.mxu0 0.0
    %542 = vmatmul.mubr.f32.gmra.mxu0 %v463
    %v543 = vpop.f32.mrf.mxu0
    %v544 = vadd.f32 %v447, %v543
    %v545 = vpop.f32.mrf.mxu0
    %v546 = vadd.f32 %v447, %v545
    %547 = vmatprep.mubr.f32.mxu0 0.0
    %548 = vmatmul.mubr.f32.gmra.mxu0 %v466
    %v549 = vpop.f32.mrf.mxu0
    %v550 = vadd.f32 %v452, %v549
    %v551 = vpop.f32.mrf.mxu0
    %v552 = vadd.f32 %v452, %v551
    %553 = vmatprep.mubr.f32.mxu0 0.0
    %554 = vmatmul.mubr.f32.gmra.mxu0 %v469
    %v555 = vpop.f32.mrf.mxu0
    %v556 = vadd.f32 %v457, %v555
    %v557 = vpop.f32.mrf.mxu0
    %v558 = vadd.f32 %v457, %v557
    %559 = vdwg.mxu0
    %v560 = vmax.f32 %v538, 0.0
    %v561 = vmax.f32 %v540, 0.0
    %v562 = vmax.f32 %v544, 0.0
    %v563 = vmax.f32 %v546, 0.0
    %v564 = vmax.f32 %v550, 0.0
    %v565 = vmax.f32 %v552, 0.0
    %v566 = vmax.f32 %v556, 0.0
    %v567 = vmax.f32 %v558, 0.0
    %v568 = vld [vmem:[%s6] sm:$0xff]
    %v569 = vld [vmem:[%s6 + $0x8] sm:$0xff]
    %v570 = vld [vmem:[%s7] sm:$0xff]
    %v571 = vld [vmem:[%s7 + $0x8] sm:$0xff]
    %573 = vset.pattern.permute.xlu0 0
    %574 = vperm.xlu0 %573, %v570
    %v575 = vpop.permute.xlu0 %574
    %578 = vset.pattern.permute.xlu0 0
    %579 = vperm.xlu0 %578, %v571
    %v580 = vpop.permute.xlu0 %579
    %vm582 = vcmask 261120
    %v584 = vsel %vm582, %v568, 0
    %v587 = vsel %vm582, %v569, 0
    %589 = vmatprep.subr.mxu0 0.0
    %590 = vmatpush1.msra.mxu0 0.0
    %591 = vmatprep.subr.mxu0 0.0
    %592 = vmatpush1.msra.mxu0 0.0
    %593 = vmatprep.subr.mxu0 0.0
    %594 = vmatpush1.msra.mxu0 0.0
    %595 = vmatprep.subr.mxu0 0.0
    %596 = vmatpush1.msra.mxu0 0.0
    %597 = vmatprep.subr.mxu0 0.0
    %598 = vmatpush1.msra.mxu0 0.0
    %599 = vmatprep.subr.mxu0 0.0
    %600 = vmatpush1.msra.mxu0 0.0
    %601 = vmatprep.subr.mxu0 0.0
    %602 = vmatpush1.msra.mxu0 0.0
    %603 = vmatprep.subr.mxu0 0.0
    %604 = vmatpush1.msra.mxu0 0.0
    %605 = vmatprep.subr.mxu0 0.0
    %606 = vmatpush1.msra.mxu0 0.0
    %607 = vmatprep.subr.mxu0 0.0
    %608 = vmatpush1.msra.mxu0 0.0
    %609 = vmatprep.subr.mxu0 0.0
    %610 = vmatpush1.msra.mxu0 0.0
    %611 = vmatprep.subr.mxu0 0.0
    %612 = vmatpush1.msra.mxu0 0.0
    %613 = vmatprep.subr.mxu0 %v567
    %614 = vmatpush1.msra.mxu0 %v566
    %615 = vmatprep.subr.mxu0 %v565
    %616 = vmatpush1.msra.mxu0 %v564
    %617 = vmatprep.subr.mxu0 %v563
    %618 = vmatpush1.msra.mxu0 %v562
    %619 = vmatprep.subr.mxu0 %v561
    %620 = vmatpush1.msra.mxu0 %v560
    %621 = vmatprep.subr.mxu0 0.0
    %622 = vmatpush2.msra.mxu0 0.0
    %623 = vmatprep.subr.mxu0 0.0
    %624 = vmatpush2.msra.mxu0 0.0
    %625 = vmatprep.subr.mxu0 0.0
    %626 = vmatpush2.msra.mxu0 0.0
    %627 = vmatprep.subr.mxu0 0.0
    %628 = vmatpush2.msra.mxu0 0.0
    %629 = vmatprep.subr.mxu0 0.0
    %630 = vmatpush2.msra.mxu0 0.0
    %631 = vmatprep.subr.mxu0 0.0
    %632 = vmatpush2.msra.mxu0 0.0
    %633 = vmatprep.subr.mxu0 0.0
    %634 = vmatpush2.msra.mxu0 0.0
    %635 = vmatprep.subr.mxu0 0.0
    %636 = vmatpush2.msra.mxu0 0.0
    %637 = vmatprep.subr.mxu0 0.0
    %638 = vmatpush2.msra.mxu0 0.0
    %639 = vmatprep.subr.mxu0 0.0
    %640 = vmatpush2.msra.mxu0 0.0
    %641 = vmatprep.subr.mxu0 0.0
    %642 = vmatpush2.msra.mxu0 0.0
    %643 = vmatprep.subr.mxu0 0.0
    %644 = vmatpush2.msra.mxu0 0.0
    %645 = vmatprep.subr.mxu0 0.0
    %646 = vmatpush2.msra.mxu0 0.0
    %647 = vmatprep.subr.mxu0 0.0
    %648 = vmatpush2.msra.mxu0 0.0
    %649 = vmatprep.subr.mxu0 0.0
    %650 = vmatpush2.msra.mxu0 0.0
    %651 = vmatprep.subr.mxu0 0.0
    %652 = vmatpush2.msra.mxu0 0.0
    %653 = vmatprep.mubr.f32.mxu0 0.0
    %654 = vmatmul.mubr.f32.gmra.mxu0 %v584
    %v655 = vpop.f32.mrf.mxu0
    %v656 = vadd.f32 %v575, %v655
    %v657 = vpop.f32.mrf.mxu0
    %v658 = vadd.f32 %v575, %v657
    %659 = vmatprep.mubr.f32.mxu0 0.0
    %660 = vmatmul.mubr.f32.gmra.mxu0 %v587
    %v661 = vpop.f32.mrf.mxu0
    %v662 = vadd.f32 %v580, %v661
    %v663 = vpop.f32.mrf.mxu0
    %v664 = vadd.f32 %v580, %v663
    %665 = vdwg.mxu0
    %v666 = vmax.f32 %v656, 0.0
    %v667 = vmax.f32 %v658, 0.0
    %v668 = vmax.f32 %v662, 0.0
    %v669 = vmax.f32 %v664, 0.0
    %v670 = vld [vmem:[%s8] sm:$0x7]
    %v671 = vld [vmem:[%s9] sm:$0x7]
    %v673 = vsel %vm219, %v671, 0
    %v676 = vsel %vm226, %v429, 0
    %v679 = vsel %vm226, %v430, 0
    %681 = vmatprep.subr.mxu0 0.0
    %682 = vmatpush1.msra.mxu0 0.0
    %683 = vmatprep.subr.mxu0 0.0
    %684 = vmatpush1.msra.mxu0 0.0
    %685 = vmatprep.subr.mxu0 0.0
    %686 = vmatpush1.msra.mxu0 0.0
    %687 = vmatprep.subr.mxu0 0.0
    %688 = vmatpush1.msra.mxu0 0.0
    %689 = vmatprep.subr.mxu0 0.0
    %690 = vmatpush1.msra.mxu0 0.0
    %691 = vmatprep.subr.mxu0 0.0
    %692 = vmatpush1.msra.mxu0 0.0
    %693 = vmatprep.subr.mxu0 0.0
    %694 = vmatpush1.msra.mxu0 0.0
    %695 = vmatprep.subr.mxu0 0.0
    %696 = vmatpush1.msra.mxu0 0.0
    %697 = vmatprep.subr.mxu0 0.0
    %698 = vmatpush1.msra.mxu0 0.0
    %699 = vmatprep.subr.mxu0 0.0
    %700 = vmatpush1.msra.mxu0 0.0
    %701 = vmatprep.subr.mxu0 0.0
    %702 = vmatpush1.msra.mxu0 0.0
    %703 = vmatprep.subr.mxu0 0.0
    %704 = vmatpush1.msra.mxu0 0.0
    %705 = vmatprep.subr.mxu0 0.0
    %706 = vmatpush1.msra.mxu0 0.0
    %707 = vmatprep.subr.mxu0 0.0
    %708 = vmatpush1.msra.mxu0 0.0
    %709 = vmatprep.subr.mxu0 %v679
    %710 = vmatpush1.msra.mxu0 %v676
    %711 = vmatprep.subr.mxu0 %v428
    %712 = vmatpush1.msra.mxu0 %v427
    %713 = vmatprep.subr.mxu0 0.0
    %714 = vmatpush2.msra.mxu0 0.0
    %715 = vmatprep.subr.mxu0 0.0
    %716 = vmatpush2.msra.mxu0 0.0
    %717 = vmatprep.subr.mxu0 0.0
    %718 = vmatpush2.msra.mxu0 0.0
    %719 = vmatprep.subr.mxu0 0.0
    %720 = vmatpush2.msra.mxu0 0.0
    %721 = vmatprep.subr.mxu0 0.0
    %722 = vmatpush2.msra.mxu0 0.0
    %723 = vmatprep.subr.mxu0 0.0
    %724 = vmatpush2.msra.mxu0 0.0
    %725 = vmatprep.subr.mxu0 0.0
    %726 = vmatpush2.msra.mxu0 0.0
    %727 = vmatprep.subr.mxu0 0.0
    %728 = vmatpush2.msra.mxu0 0.0
    %729 = vmatprep.subr.mxu0 0.0
    %730 = vmatpush2.msra.mxu0 0.0
    %731 = vmatprep.subr.mxu0 0.0
    %732 = vmatpush2.msra.mxu0 0.0
    %733 = vmatprep.subr.mxu0 0.0
    %734 = vmatpush2.msra.mxu0 0.0
    %735 = vmatprep.subr.mxu0 0.0
    %736 = vmatpush2.msra.mxu0 0.0
    %737 = vmatprep.subr.mxu0 0.0
    %738 = vmatpush2.msra.mxu0 0.0
    %739 = vmatprep.subr.mxu0 0.0
    %740 = vmatpush2.msra.mxu0 0.0
    %741 = vmatprep.subr.mxu0 0.0
    %742 = vmatpush2.msra.mxu0 0.0
    %743 = vmatprep.subr.mxu0 0.0
    %744 = vmatpush2.msra.mxu0 0.0
    %745 = vmatprep.mubr.f32.mxu0 0.0
    %746 = vmatmul.mubr.f32.gmra.mxu0 %v673
    %v747 = vpop.f32.mrf.mxu0
    %v748 = vadd.f32 0.0, %v747
    %v749 = vpop.f32.mrf.mxu0
    %v750 = vadd.f32 0.0, %v749
    %751 = vdwg.mxu0
    %vm752 = vcmask 130048
    %v754 = vsel %vm752, %v670, 0
    %756 = vmatprep.subr.mxu0 0.0
    %757 = vmatpush1.msra.mxu0 0.0
    %758 = vmatprep.subr.mxu0 0.0
    %759 = vmatpush1.msra.mxu0 0.0
    %760 = vmatprep.subr.mxu0 0.0
    %761 = vmatpush1.msra.mxu0 0.0
    %762 = vmatprep.subr.mxu0 0.0
    %763 = vmatpush1.msra.mxu0 0.0
    %764 = vmatprep.subr.mxu0 0.0
    %765 = vmatpush1.msra.mxu0 0.0
    %766 = vmatprep.subr.mxu0 0.0
    %767 = vmatpush1.msra.mxu0 0.0
    %768 = vmatprep.subr.mxu0 0.0
    %769 = vmatpush1.msra.mxu0 0.0
    %770 = vmatprep.subr.mxu0 0.0
    %771 = vmatpush1.msra.mxu0 0.0
    %772 = vmatprep.subr.mxu0 0.0
    %773 = vmatpush1.msra.mxu0 0.0
    %774 = vmatprep.subr.mxu0 0.0
    %775 = vmatpush1.msra.mxu0 0.0
    %776 = vmatprep.subr.mxu0 0.0
    %777 = vmatpush1.msra.mxu0 0.0
    %778 = vmatprep.subr.mxu0 0.0
    %779 = vmatpush1.msra.mxu0 0.0
    %780 = vmatprep.subr.mxu0 0.0
    %781 = vmatpush1.msra.mxu0 0.0
    %782 = vmatprep.subr.mxu0 0.0
    %783 = vmatpush1.msra.mxu0 0.0
    %784 = vmatprep.subr.mxu0 %v669
    %785 = vmatpush1.msra.mxu0 %v668
    %786 = vmatprep.subr.mxu0 %v667
    %787 = vmatpush1.msra.mxu0 %v666
    %788 = vmatprep.subr.mxu0 0.0
    %789 = vmatpush2.msra.mxu0 0.0
    %790 = vmatprep.subr.mxu0 0.0
    %791 = vmatpush2.msra.mxu0 0.0
    %792 = vmatprep.subr.mxu0 0.0
    %793 = vmatpush2.msra.mxu0 0.0
    %794 = vmatprep.subr.mxu0 0.0
    %795 = vmatpush2.msra.mxu0 0.0
    %796 = vmatprep.subr.mxu0 0.0
    %797 = vmatpush2.msra.mxu0 0.0
    %798 = vmatprep.subr.mxu0 0.0
    %799 = vmatpush2.msra.mxu0 0.0
    %800 = vmatprep.subr.mxu0 0.0
    %801 = vmatpush2.msra.mxu0 0.0
    %802 = vmatprep.subr.mxu0 0.0
    %803 = vmatpush2.msra.mxu0 0.0
    %804 = vmatprep.subr.mxu0 0.0
    %805 = vmatpush2.msra.mxu0 0.0
    %806 = vmatprep.subr.mxu0 0.0
    %807 = vmatpush2.msra.mxu0 0.0
    %808 = vmatprep.subr.mxu0 0.0
    %809 = vmatpush2.msra.mxu0 0.0
    %810 = vmatprep.subr.mxu0 0.0
    %811 = vmatpush2.msra.mxu0 0.0
    %812 = vmatprep.subr.mxu0 0.0
    %813 = vmatpush2.msra.mxu0 0.0
    %814 = vmatprep.subr.mxu0 0.0
    %815 = vmatpush2.msra.mxu0 0.0
    %816 = vmatprep.subr.mxu0 0.0
    %817 = vmatpush2.msra.mxu0 0.0
    %818 = vmatprep.subr.mxu0 0.0
    %819 = vmatpush2.msra.mxu0 0.0
    %820 = vmatprep.mubr.f32.mxu0 0.0
    %821 = vmatmul.mubr.f32.gmra.mxu0 %v754
    %v822 = vpop.f32.mrf.mxu0
    %v823 = vadd.f32 %v748, %v822
    %v824 = vpop.f32.mrf.mxu0
    %v825 = vadd.f32 %v750, %v824
    %826 = vdwg.mxu0
    %v827 = vld [vmem:[%s10] sm:$0x7]
    %829 = vset.pattern.permute.xlu0 0
    %830 = vperm.xlu0 %829, %v827
    %v831 = vpop.permute.xlu0 %830
    %v833 = vadd.f32 %v823, %v831
    %v834 = vadd.f32 %v825, %v831
    %v837 = vcombine.low %v833, %v834
    %839 = vst [vmem:[#allocation2] sm:$0x77] %v837
    // Predicated region
    $region46: #{tpu_custom_call.1} parent=1 // pred_check
      _
    $region47: #{tpu_custom_call.1} parent=1 // pred_check_branch
      %841 = sbr.rel (0) target = $region49
    $region48: #{tpu_custom_call.1} parent=1 // pred_region
      %s843 = ssub.s32 128, 128
      %844 = vsyncadd [#allocation3], %s843
      %s846 = sshll.u32 [#allocation2], 4
      %s847 = int_to_ptr.vmem [resolvable:$true] %s846
      %849 = dma.vmem_to_hbm [thread:$0]  %s847, 128, %s11, [#allocation3]
    $region49: #{tpu_custom_call.1} parent=1 // pred_fallthru
      _
    // Predicated region
    $region50: #{tpu_custom_call.1} parent=1 // pred_check
      _
    $region51: #{tpu_custom_call.1} parent=1 // pred_check_branch
      %851 = sbr.rel (0) target = $region53
    $region52: #{tpu_custom_call.1} parent=1 // pred_region
      %852 = dma.done [#allocation3], 128
    $region53: #{tpu_custom_call.1} parent=1 // pred_fallthru
      _
    %853 = vsyncpa [#allocation3], 1

</llo_original>
